<compile_context>
chip_gen: v6e
topology: v6e:2x2x1
jax: 0.10.0
libtpu: 0.0.40
codegen_flags: <defaults>
</compile_context>

<pallas_src>
import functools
import math

import jax
import jax.numpy as jnp
from jax.experimental import pallas as pl
from jax.experimental.pallas import tpu as pltpu


_LANE = 128
_TARGET_BLOCK_BYTES = 12 * 1024 * 1024   # ~8 MiB in + ~4 MiB out per grid step
_VMEM_LIMIT_BYTES = 32 * 1024 * 1024     # 2x(in+out) double-buffered ~= 24 MiB
_MIN_GRID_STEPS = 4                      # keep >=4 steps so v7x's 2 TCs share work


def _round_up(a, m):
    return -(-a // m) * m


def _sublane_multiple(dtype):
    # Sub-32-bit dtypes pack along sublanes (bf16 vreg = 16x128); align block
    # row counts to the packed tile so block-edge loads/stores stay unmasked.
    return 8 * max(1, 4 // jnp.dtype(dtype).itemsize)


def _pick_row_tile(rows, vmem_bytes_per_row, sub):
    """Row tile targeting ~_TARGET_BLOCK_BYTES of (padded) VMEM per grid step."""
    tr = max(1, _TARGET_BLOCK_BYTES // max(vmem_bytes_per_row, 1))
    if rows >= _MIN_GRID_STEPS * sub:
        tr = min(tr, _round_up(rows, _MIN_GRID_STEPS) // _MIN_GRID_STEPS)
    tr = min(tr, rows)
    if rows >= sub:
        tr = max(sub, (tr // sub) * sub)
    else:
        tr = rows  # full extent is allowed when smaller than one sublane tile
    return tr
    # TODO(synk): for extremely large C the 8-row minimum block can exceed the
    # VMEM budget; a lane-tiled 2-D grid would make the tile independent of C.


# ----------------------------- even-L fast path -----------------------------

def _pairs_kernel(x_ref, o_ref, *, c, k):
    """x_ref: (TR, 2*k*c) -- k pooling pairs per row;  o_ref: (TR, k*c)."""
    x = x_ref[...]
    if k == 1:
        # One pooling pair per row: max of the two lane halves (pure VPU op).
        o_ref[...] = jnp.maximum(x[:, :c], x[:, c:])
    else:
        # One wide shifted max gives every pair's max at lane offset 2*j*c:
        #   m[:, p] = max(x[:, p], x[:, p + c]).
        # Then a single lane compaction packs the k chunks into the dense
        # (128-multiple) output row.  Cheaper than slicing both halves of every
        # pair; the XLU work stays well under the HBM/DMA long pole.
        m = jnp.maximum(x[:, : (2 * k - 1) * c], x[:, c:])
        o_ref[...] = jnp.concatenate(
            [m[:, 2 * j * c:(2 * j + 1) * c] for j in range(k)], axis=-1)


def _pool_even(x):
    b, l, c = x.shape
    l_out = l // 2
    rows = b * l_out  # one output row per pooling pair (exact for even L)

    # Lane-densifying fold: pack k consecutive pairs per block row so the
    # stored last dim is a multiple of 128 lanes (unmasked vst, dense VMEM).
    k = 1
    if c % _LANE != 0:
        base_k = _LANE // math.gcd(c, _LANE)
        if base_k <= 16 and rows % base_k == 0:
            k = base_k
        # TODO(synk): when rows % base_k != 0 we fall back to masked stores; a
        # remainder pallas_call would need an output concat (an extra HBM pass)
        # which costs more than the masked stores it saves.

    rows_f = rows // k
    in_w, out_w = 2 * k * c, k * c
    x2 = x.reshape(rows_f, in_w)  # free row-major view

    itemsize = jnp.dtype(x.dtype).itemsize
    # VMEM footprint per block row uses lane-PADDED widths (<128-lane rows pad
    # to 128 lanes in VMEM), so narrow-C cases cannot blow the VMEM budget.
    vmem_row = (_round_up(in_w, _LANE) + _round_up(out_w, _LANE)) * itemsize
    sub = _sublane_multiple(x.dtype)
    tr = _pick_row_tile(rows_f, vmem_row, sub)

    out2 = pl.pallas_call(
        functools.partial(_pairs_kernel, c=c, k=k),
        out_shape=jax.ShapeDtypeStruct((rows_f, out_w), x.dtype),
        grid_spec=pltpu.PrefetchScalarGridSpec(
            num_scalar_prefetch=0,
            grid=(pl.cdiv(rows_f, tr),),
            in_specs=[pl.BlockSpec((tr, in_w), lambda i: (i, 0))],
            out_specs=pl.BlockSpec((tr, out_w), lambda i: (i, 0)),
        ),
        compiler_params=pltpu.CompilerParams(
            dimension_semantics=("parallel",),
            vmem_limit_bytes=_VMEM_LIMIT_BYTES,
        ),
    )(x2)

    return out2.reshape(b, l_out, c)  # free view back to (B, L_out, C)


# ------------------------- odd-L path (no HBM copy) -------------------------

def _pairs_sublane_kernel(x_ref, o_ref, *, tl):
    """x_ref: (1, 2*tl, C);  o_ref: (1, tl, C).  Pair max across sublane pairs."""
    a = x_ref[0, pl.ds(0, tl, stride=2), :]  # first element of each pair
    b = x_ref[0, pl.ds(1, tl, stride=2), :]  # second element of each pair
    o_ref[0] = jnp.maximum(a, b)


def _pool_odd(x):
    b, l, c = x.shape
    l_out = l // 2

    itemsize = jnp.dtype(x.dtype).itemsize
    c_pad = _round_up(c, _LANE)
    vmem_row = 3 * c_pad * itemsize  # 2 input rows + 1 output row, VMEM-padded
    sub = _sublane_multiple(x.dtype)
    tl = _pick_row_tile(l_out, vmem_row, sub)
    # Both block sublane dims (2*tl in, tl out) must be 8/16/32-aligned; the
    # last (possibly oversized) block is handled by Pallas edge masking, so the
    # ragged input row beyond 2*l_out is never consumed.
    tl = max(sub, _round_up(tl, sub))
    grid = (b, pl.cdiv(l_out, tl))

    return pl.pallas_call(
        functools.partial(_pairs_sublane_kernel, tl=tl),
        out_shape=jax.ShapeDtypeStruct((b, l_out, c), x.dtype),
        grid_spec=pltpu.PrefetchScalarGridSpec(
            num_scalar_prefetch=0,
            grid=grid,
            in_specs=[pl.BlockSpec((1, 2 * tl, c), lambda bi, i: (bi, i, 0))],
            out_specs=pl.BlockSpec((1, tl, c), lambda bi, i: (bi, i, 0)),
        ),
        compiler_params=pltpu.CompilerParams(
            dimension_semantics=("parallel", "parallel"),
            vmem_limit_bytes=_VMEM_LIMIT_BYTES,
        ),
    )(x)


# --------------------------------- wrapper ----------------------------------

def maxpool_layer(x, kernel_size=2, stride=2):
    """Pallas equivalent of MaxPoolLayer(kernel_size=2, stride=2).forward."""
    assert kernel_size == 2 and stride == 2, "module defaults only"
    b, l, c = x.shape
    l_out = l // 2
    assert l_out >= 1, "sequence too short for pooling"

    if l % 2 == 0:
        return _pool_even(x)

    # Odd L: MaxPool1d drops the ragged last position.  Read around it with a
    # per-batch 3-D grid instead of slicing in the wrapper (a slice feeding the
    # pallas_call boundary materializes a full HBM copy -- ~2x the traffic of
    # the pool itself).
    try:
        return _pool_odd(x)
    except Exception:
        # TODO(synk): fallback only if the strided sublane load fails to lower;
        # it costs one extra HBM copy of the (truncated) input.
        return _pool_even(x[:, : 2 * l_out, :])


def _reference(x):
    b, l, c = x.shape
    l_out = l // 2
    return jnp.max(x[:, : 2 * l_out, :].reshape(b, l_out, 2, c), axis=2)


if __name__ == "__main__":
    cases = [
        ((2, 16, 32), jnp.float32),    # even L, lane fold k=4 -> 128-lane rows
        ((2, 16, 48), jnp.float32),    # even L, generalized fold k=8 (384 lanes)
        ((4, 16, 8), jnp.float32),     # even L, tiny channels, k=16 fold
        ((2, 9, 128), jnp.float32),    # odd (ragged) L, no-copy 3-D path
        ((2, 32, 128), jnp.bfloat16),  # even L, already lane-dense, bf16 packing
    ]
    keys = jax.random.split(jax.random.PRNGKey(0), len(cases))
    for key, (shape, dtype) in zip(keys, cases):
        x = jax.random.normal(key, shape, dtype=dtype)
        out = jax.block_until_ready(maxpool_layer(x))
        ref = _reference(x)
        assert out.shape == ref.shape, (shape, out.shape, ref.shape)
        assert out.dtype == x.dtype, (shape, out.dtype)
        assert jnp.array_equal(out, ref), f"mismatch vs reference for {shape} {dtype}"
    print("KERNEL_OK")
</pallas_src>

<mosaic_0001>
module attributes {stable_mosaic.version = 11 : i64} {
  func.func @_pairs_kernel(%arg0: i32, %arg1: memref<4x256xf32, #tpu.memory_space<vmem>>, %arg2: memref<4x128xf32, #tpu.memory_space<vmem>>) attributes {dimension_semantics = [#tpu.dimension_semantics<parallel>], iteration_bounds = array<i64: 1>, scalar_prefetch = 0 : i64, scratch_operands = 0 : i64, tpu.core_type = #tpu.core_type<tc>, window_params = [{transform_indices = @transform_0, window_bounds = array<i64: 4, 256>}, {transform_indices = @transform_1, window_bounds = array<i64: 4, 128>}]} {
    %c0 = arith.constant 0 : index
    %c0_0 = arith.constant 0 : index
    %0 = vector.load %arg1[%c0, %c0_0] : memref<4x256xf32, #tpu.memory_space<vmem>>, vector<4x256xf32>
    %1 = vector.extract_strided_slice %0 {offsets = [0, 0], sizes = [4, 224], strides = [1, 1]} : vector<4x256xf32> to vector<4x224xf32>
    %2 = vector.extract_strided_slice %0 {offsets = [0, 32], sizes = [4, 224], strides = [1, 1]} : vector<4x256xf32> to vector<4x224xf32>
    %3 = arith.maximumf %1, %2 : vector<4x224xf32>
    %4 = vector.extract_strided_slice %3 {offsets = [0, 0], sizes = [4, 32], strides = [1, 1]} : vector<4x224xf32> to vector<4x32xf32>
    %5 = vector.extract_strided_slice %3 {offsets = [0, 64], sizes = [4, 32], strides = [1, 1]} : vector<4x224xf32> to vector<4x32xf32>
    %6 = vector.extract_strided_slice %3 {offsets = [0, 128], sizes = [4, 32], strides = [1, 1]} : vector<4x224xf32> to vector<4x32xf32>
    %7 = vector.extract_strided_slice %3 {offsets = [0, 192], sizes = [4, 32], strides = [1, 1]} : vector<4x224xf32> to vector<4x32xf32>
    %8 = tpu.concatenate %4, %5, %6, %7 in 1 : vector<4x32xf32>, vector<4x32xf32>, vector<4x32xf32>, vector<4x32xf32> -> vector<4x128xf32>
    %c0_1 = arith.constant 0 : index
    %c0_2 = arith.constant 0 : index
    %9 = vector.load %arg2[%c0_1, %c0_2] : memref<4x128xf32, #tpu.memory_space<vmem>>, vector<4x128xf32>
    tpu.vector_store %arg2[%c0_1, %c0_2], %8 {strides = array<i32>} : memref<4x128xf32, #tpu.memory_space<vmem>>, vector<4x128xf32>,
    return
  }
  func.func @transform_0(%arg0: i32) -> (i32, i32) {
    %c0_i32 = arith.constant 0 : i32
    %c0_i32_0 = arith.constant 0 : i32
    return %arg0, %c0_i32 : i32, i32
  }
  func.func @transform_1(%arg0: i32) -> (i32, i32) {
    %c0_i32 = arith.constant 0 : i32
    %c0_i32_0 = arith.constant 0 : i32
    return %arg0, %c0_i32 : i32, i32
  }
}

</mosaic_0001>

<llo_original>
// kernel: tpu_custom_call.1
$region0: #{tpu_custom_call.1}
  #allocation0 [shape = 'u32[]', space=smem, size = 0x4, offset = 0x4, fixed_abs, tag = 'smem constant byte address 0x4 - core index']
  #allocation1 [shape = 'u32[144,128]{1,0:T(1,128)}', space=vmem, size = 0x12000, scoped, tag = 'internal scratch']
  %s0 = inlined_call_operand.hbm [shape: f32[4,256], index: 0, kind: input, shape index: {}]
  %s1 = inlined_call_operand.hbm [shape: f32[4,128], index: 1, kind: output, shape index: {}]
  %s2 = sld [smem:[#allocation0]]
  $region18: #{tpu_custom_call.1} parent=0
    _
  %s4 = ssub.s32 1, %s2
  %s5 = scalar_select 0, %s4, %s2
  $region1: #{tpu_custom_call.1} parent=0
    #allocation2 [shape = 'u8[4096]{0}', space=vmem, size = 0x1000, scoped, tag = 'input window, operand 0, single buffered']
    #allocation3 [shape = 's32[1]{0}', space=sflag, size = 0x4, scoped, tag = 'scoped memory for tpu_custom_call.1']
    #allocation4 [shape = 's32[1]{0}', space=sflag, size = 0x4, scoped, tag = 'scoped memory for tpu_custom_call.1']
    #allocation5 [shape = 'u8[2048]{0}', space=vmem, size = 0x800, scoped, tag = 'output window, operand 0, single buffered']
    %6 = vsyncpa [#allocation3], 0
    %7 = vsyncpa [#allocation4], 0
    // Predicated region
    $region2: #{tpu_custom_call.1} parent=1 // pred_check
      _
    $region3: #{tpu_custom_call.1} parent=1 // pred_check_branch
      %9 = sbr.rel (0) target = $region5
    $region4: #{tpu_custom_call.1} parent=1 // pred_region
      %s11 = ssub.s32 128, 128
      %12 = vsyncadd [#allocation3], %s11
      %s14 = sshll.u32 [#allocation2], 4
      %s15 = int_to_ptr.vmem [resolvable:$true] %s14
      %17 = dma.hbm_to_vmem [thread:$0]  %s0, 128, %s15, [#allocation3]
    $region5: #{tpu_custom_call.1} parent=1 // pred_fallthru
      _
    // Predicated region
    $region6: #{tpu_custom_call.1} parent=1 // pred_check
      _
    $region7: #{tpu_custom_call.1} parent=1 // pred_check_branch
      %19 = sbr.rel (0) target = $region9
    $region8: #{tpu_custom_call.1} parent=1 // pred_region
      %20 = dma.done [#allocation3], 128
    $region9: #{tpu_custom_call.1} parent=1 // pred_fallthru
      _
    %v21 = vld [vmem:[#allocation2] sm:$0xff]
    %23 = vrot.lane.b32.xlu0 %v21, 96
    %v24 = vpop.permute.xlu0 %23
    %v25 = vrot.slane %v24, 4
    %vm26 = vcmask 785408
    %v27 = vsel %vm26, %v24, %v25
    %v29 = vmax.f32 %v21, %v27
    %31 = vrot.lane.b32.xlu0 %v29, 96
    %v32 = vpop.permute.xlu0 %31
    %v34 = vcombine.high %v29, %v29
    %35 = vrot.lane.b32.xlu0 %v34, 64
    %v36 = vpop.permute.xlu0 %35
    %38 = vrot.lane.b32.xlu0 %v34, 32
    %v39 = vpop.permute.xlu0 %38
    %vm41 = vcmask 261120
    %v42 = vsel %vm41, %v29, %v32
    %vm43 = vcmask 523264
    %v44 = vsel %vm43, %v42, %v36
    %v45 = vsel %vm26, %v44, %v39
    %46 = vst [vmem:[#allocation5] sm:$0xf] %v45
    // Predicated region
    $region10: #{tpu_custom_call.1} parent=1 // pred_check
      _
    $region11: #{tpu_custom_call.1} parent=1 // pred_check_branch
      %48 = sbr.rel (0) target = $region13
    $region12: #{tpu_custom_call.1} parent=1 // pred_region
      %s50 = ssub.s32 64, 64
      %51 = vsyncadd [#allocation4], %s50
      %s53 = sshll.u32 [#allocation5], 4
      %s54 = int_to_ptr.vmem [resolvable:$true] %s53
      %56 = dma.vmem_to_hbm [thread:$0]  %s54, 64, %s1, [#allocation4]
    $region13: #{tpu_custom_call.1} parent=1 // pred_fallthru
      _
    // Predicated region
    $region14: #{tpu_custom_call.1} parent=1 // pred_check
      _
    $region15: #{tpu_custom_call.1} parent=1 // pred_check_branch
      %58 = sbr.rel (0) target = $region17
    $region16: #{tpu_custom_call.1} parent=1 // pred_region
      %59 = dma.done [#allocation4], 64
    $region17: #{tpu_custom_call.1} parent=1 // pred_fallthru
      _
    %60 = vsyncpa [#allocation3], 1
    %61 = vsyncpa [#allocation4], 1

</llo_original>
